<compile_context>
chip_gen: v6e
topology: v6e:2x2x1
jax: 0.10.0
libtpu: 0.0.40
codegen_flags: <defaults>
</compile_context>

<pallas_src>
import jax
import jax.numpy as jnp
from jax.experimental import pallas as pl
from jax.experimental.pallas import tpu as pltpu

STATIC_DIM = 32
LSTM_DIM = 16
FUSED_DIM = STATIC_DIM + LSTM_DIM
HIDDEN = 16
OUT_DIM = 1


def _risk_kernel(static_ref, lstm_ref, w1a_ref, w1b_ref, b1_ref, w2t_ref, b2_ref,
                 out_ref):
    # Cast activations to bf16 just before the MXU pushes; accumulate in f32.
    s = static_ref[...].astype(jnp.bfloat16)          # (tb, 32)
    l = lstm_ref[...].astype(jnp.bfloat16)            # (tb, 16)

    # Linear(48 -> 16) over the virtual concat: two dots into one f32 accumulator.
    h = jnp.dot(s, w1a_ref[...], preferred_element_type=jnp.float32)
    h = h + jnp.dot(l, w1b_ref[...], preferred_element_type=jnp.float32)
    h = jnp.maximum(h + b1_ref[...], 0.0)              # (tb, 16) f32, ReLU

    # Lane-dense epilogue: transpose h (XLU op, hidden under DMA) and emit the
    # logits as a (1, tb) row so the store is wide and unmasked.
    ht = h.T                                           # (16, tb)
    logit = jnp.dot(w2t_ref[...], ht,
                    preferred_element_type=jnp.float32) + b2_ref[...]  # (1, tb)
    out_ref[...] = jax.nn.sigmoid(logit).astype(out_ref.dtype)


def _choose_tile(batch, block_b):
    """Pick a batch tile: big enough to amortize per-step overhead, >=2 grid
    steps for large batches (megacore), 8/128-friendly where possible."""
    if batch <= block_b:
        if batch <= 1024:
            return batch                               # single full-dim tile
        # split into (at least) two steps, rounded to a lane-friendly multiple
        half = -(-batch // 2)
        return ((half + 127) // 128) * 128
    return max(8, (block_b // 8) * 8)


def behaviour_risk_scoring(static_vec, lstm_vec, w1, b1, w2, b2,
                           *, block_b=32768, compute_dtype=jnp.bfloat16):
    """Fused concat + MLP + sigmoid, tiled over the batch dimension."""
    B = static_vec.shape[0]
    assert static_vec.shape == (B, STATIC_DIM)
    assert lstm_vec.shape == (B, LSTM_DIM)
    assert w1.shape == (FUSED_DIM, HIDDEN)

    tb = _choose_tile(B, block_b)
    nb = pl.cdiv(B, tb)

    # Split W1 in the wrapper (tiny, one-time) so the kernel never concatenates.
    w1a = w1[:STATIC_DIM].astype(compute_dtype)        # (32, 16)
    w1b = w1[STATIC_DIM:].astype(compute_dtype)        # (16, 16)
    b1f = b1.reshape(1, HIDDEN).astype(jnp.float32)    # (1, 16)
    w2t = w2.reshape(HIDDEN, OUT_DIM).T.astype(jnp.float32)   # (1, 16)
    b2f = b2.reshape(1, OUT_DIM).astype(jnp.float32)   # (1, 1)

    def tile_spec(feat):
        # Per-grid-step batch tile (tb, feat); last dim equals the full array dim.
        return pl.BlockSpec((tb, feat), lambda i: (i, 0))

    def const_spec(shape):
        # Grid-invariant parameter block: stays resident in VMEM across steps.
        return pl.BlockSpec(shape, lambda i: (0,) * len(shape))

    out2d = pl.pallas_call(
        _risk_kernel,
        out_shape=jax.ShapeDtypeStruct((nb, tb), jnp.float32),
        grid=(nb,),
        in_specs=[
            tile_spec(STATIC_DIM),
            tile_spec(LSTM_DIM),
            const_spec((STATIC_DIM, HIDDEN)),
            const_spec((LSTM_DIM, HIDDEN)),
            const_spec((1, HIDDEN)),
            const_spec((OUT_DIM, HIDDEN)),
            const_spec((1, OUT_DIM)),
        ],
        out_specs=pl.BlockSpec((1, tb), lambda i: (i, 0)),
        compiler_params=pltpu.CompilerParams(
            dimension_semantics=("parallel",),          # megacore sharding on v7x
            vmem_limit_bytes=48 * 1024 * 1024),         # headroom under v7x's 64 MiB/TC
    )(static_vec, lstm_vec, w1a, w1b, b1f, w2t, b2f)

    # (nb, tb) -> (nb*tb, 1) is a free contiguous reshape; slice off the OOB tail.
    return out2d.reshape(nb * tb, OUT_DIM)[:B]


def init_params(key):
    """Deterministic init matching nn.Linear default U(-1/sqrt(fan_in), 1/sqrt(fan_in))."""
    k1, k2, k3, k4 = jax.random.split(key, 4)
    bound1 = 1.0 / jnp.sqrt(FUSED_DIM)
    w1 = jax.random.uniform(k1, (FUSED_DIM, HIDDEN), jnp.float32, -bound1, bound1)
    b1 = jax.random.uniform(k2, (1, HIDDEN), jnp.float32, -bound1, bound1)
    bound2 = 1.0 / jnp.sqrt(HIDDEN)
    w2 = jax.random.uniform(k3, (HIDDEN, OUT_DIM), jnp.float32, -bound2, bound2)
    b2 = jax.random.uniform(k4, (1, OUT_DIM), jnp.float32, -bound2, bound2)
    return w1, b1, w2, b2


def reference_f32(static_vec, lstm_vec, w1, b1, w2, b2):
    """Exact f32 reference of the PyTorch module."""
    fused = jnp.concatenate([static_vec, lstm_vec], axis=1)
    h = jnp.maximum(fused @ w1 + b1, 0.0)
    return jax.nn.sigmoid(h @ w2 + b2)


def reference_mixed(static_vec, lstm_vec, w1, b1, w2, b2,
                    compute_dtype=jnp.bfloat16):
    """Reference mirroring the kernel's bf16-input / f32-accumulate math."""
    sa = static_vec.astype(compute_dtype)
    la = lstm_vec.astype(compute_dtype)
    w1a = w1[:STATIC_DIM].astype(compute_dtype)
    w1b = w1[STATIC_DIM:].astype(compute_dtype)
    h = (jnp.dot(sa, w1a, preferred_element_type=jnp.float32)
         + jnp.dot(la, w1b, preferred_element_type=jnp.float32)
         + b1.astype(jnp.float32))
    h = jnp.maximum(h, 0.0)
    logit = jnp.dot(h, w2.astype(jnp.float32),
                    preferred_element_type=jnp.float32) + b2.astype(jnp.float32)
    return jax.nn.sigmoid(logit)


if __name__ == "__main__":
    key = jax.random.PRNGKey(0)
    k_params, k_static, k_lstm = jax.random.split(key, 3)
    w1, b1, w2, b2 = init_params(k_params)

    # Small smoke test (single tile, tb == B).
    B = 2
    static_vec = jax.random.normal(k_static, (B, STATIC_DIM), jnp.float32)
    lstm_vec = jax.random.normal(k_lstm, (B, LSTM_DIM), jnp.float32)

    out = behaviour_risk_scoring(static_vec, lstm_vec, w1, b1, w2, b2)
    out = jax.block_until_ready(out)
    assert out.shape == (B, OUT_DIM)
    ref_m = reference_mixed(static_vec, lstm_vec, w1, b1, w2, b2)
    ref_f = reference_f32(static_vec, lstm_vec, w1, b1, w2, b2)
    assert jnp.allclose(out, ref_m, atol=1e-4, rtol=1e-4)
    assert jnp.allclose(out, ref_f, atol=2e-2, rtol=2e-2)

    # Multi-tile + ragged-tail test (small tile to exercise the batch grid and
    # the partial OOB last tile: grid = cdiv(40, 16) = 3).
    B2 = 40
    static_vec2 = jax.random.normal(jax.random.PRNGKey(1), (B2, STATIC_DIM), jnp.float32)
    lstm_vec2 = jax.random.normal(jax.random.PRNGKey(2), (B2, LSTM_DIM), jnp.float32)
    out2 = behaviour_risk_scoring(static_vec2, lstm_vec2, w1, b1, w2, b2, block_b=16)
    out2 = jax.block_until_ready(out2)
    assert out2.shape == (B2, OUT_DIM)
    ref2_m = reference_mixed(static_vec2, lstm_vec2, w1, b1, w2, b2)
    ref2_f = reference_f32(static_vec2, lstm_vec2, w1, b1, w2, b2)
    assert jnp.allclose(out2, ref2_m, atol=1e-4, rtol=1e-4)
    assert jnp.allclose(out2, ref2_f, atol=2e-2, rtol=2e-2)

    print("KERNEL_OK")
</pallas_src>

<mosaic_0001>
module attributes {stable_mosaic.version = 11 : i64} {
  func.func @_risk_kernel(%arg0: i32, %arg1: memref<2x32xf32, #tpu.memory_space<vmem>>, %arg2: memref<2x16xf32, #tpu.memory_space<vmem>>, %arg3: memref<32x16xbf16, #tpu.memory_space<vmem>>, %arg4: memref<16x16xbf16, #tpu.memory_space<vmem>>, %arg5: memref<1x16xf32, #tpu.memory_space<vmem>>, %arg6: memref<1x16xf32, #tpu.memory_space<vmem>>, %arg7: memref<1x1xf32, #tpu.memory_space<vmem>>, %arg8: memref<1x2xf32, #tpu.memory_space<vmem>>) attributes {dimension_semantics = [#tpu.dimension_semantics<parallel>], iteration_bounds = array<i64: 1>, scalar_prefetch = 0 : i64, scratch_operands = 0 : i64, tpu.core_type = #tpu.core_type<tc>, window_params = [{transform_indices = @transform_0, window_bounds = array<i64: 2, 32>}, {transform_indices = @transform_1, window_bounds = array<i64: 2, 16>}, {pipeline_mode = #tpu.pipeline_mode<synchronous>, transform_indices = @transform_2, window_bounds = array<i64: 32, 16>}, {pipeline_mode = #tpu.pipeline_mode<synchronous>, transform_indices = @transform_3, window_bounds = array<i64: 16, 16>}, {pipeline_mode = #tpu.pipeline_mode<synchronous>, transform_indices = @transform_4, window_bounds = array<i64: 1, 16>}, {pipeline_mode = #tpu.pipeline_mode<synchronous>, transform_indices = @transform_5, window_bounds = array<i64: 1, 16>}, {pipeline_mode = #tpu.pipeline_mode<synchronous>, transform_indices = @transform_6, window_bounds = array<i64: 1, 1>}, {transform_indices = @transform_7, window_bounds = array<i64: 1, 2>}]} {
    %c0 = arith.constant 0 : index
    %c0_0 = arith.constant 0 : index
    %0 = vector.load %arg1[%c0, %c0_0] : memref<2x32xf32, #tpu.memory_space<vmem>>, vector<2x32xf32>
    %1 = arith.truncf %0 : vector<2x32xf32> to vector<2x32xbf16>
    %c0_1 = arith.constant 0 : index
    %c0_2 = arith.constant 0 : index
    %2 = vector.load %arg2[%c0_1, %c0_2] : memref<2x16xf32, #tpu.memory_space<vmem>>, vector<2x16xf32>
    %3 = arith.truncf %2 : vector<2x16xf32> to vector<2x16xbf16>
    %c0_3 = arith.constant 0 : index
    %c0_4 = arith.constant 0 : index
    %4 = vector.load %arg3[%c0_3, %c0_4] : memref<32x16xbf16, #tpu.memory_space<vmem>>, vector<32x16xbf16>
    %cst = arith.constant dense<0.000000e+00> : vector<2x16xf32>
    %5 = tpu.matmul %1, %4, %cst {dimension_numbers = #tpu.dot_dimension_numbers<[1], [0], [0], [1], [0, 0, 1, 1], [], []>} : vector<2x32xbf16>, vector<32x16xbf16>, vector<2x16xf32> -> vector<2x16xf32>
    %c0_5 = arith.constant 0 : index
    %c0_6 = arith.constant 0 : index
    %6 = vector.load %arg4[%c0_5, %c0_6] : memref<16x16xbf16, #tpu.memory_space<vmem>>, vector<16x16xbf16>
    %cst_7 = arith.constant dense<0.000000e+00> : vector<2x16xf32>
    %7 = tpu.matmul %3, %6, %cst_7 {dimension_numbers = #tpu.dot_dimension_numbers<[1], [0], [0], [1], [0, 0, 1, 1], [], []>} : vector<2x16xbf16>, vector<16x16xbf16>, vector<2x16xf32> -> vector<2x16xf32>
    %8 = arith.addf %5, %7 : vector<2x16xf32>
    %c0_8 = arith.constant 0 : index
    %c0_9 = arith.constant 0 : index
    %9 = vector.load %arg5[%c0_8, %c0_9] : memref<1x16xf32, #tpu.memory_space<vmem>>, vector<1x16xf32>
    %10 = vector.broadcast %9 : vector<1x16xf32> to vector<2x16xf32>
    %11 = arith.addf %8, %10 : vector<2x16xf32>
    %cst_10 = arith.constant 0.000000e+00 : f32
    %12 = vector.broadcast %cst_10 : f32 to vector<2x16xf32>
    %13 = arith.maximumf %11, %12 : vector<2x16xf32>
    %14 = tpu.transpose %13, [1, 0] : vector<2x16xf32> -> vector<16x2xf32>
    %c0_11 = arith.constant 0 : index
    %c0_12 = arith.constant 0 : index
    %15 = vector.load %arg6[%c0_11, %c0_12] : memref<1x16xf32, #tpu.memory_space<vmem>>, vector<1x16xf32>
    %cst_13 = arith.constant dense<0.000000e+00> : vector<1x2xf32>
    %16 = tpu.matmul %15, %14, %cst_13 {dimension_numbers = #tpu.dot_dimension_numbers<[1], [0], [0], [1], [0, 0, 1, 1], [], []>} : vector<1x16xf32>, vector<16x2xf32>, vector<1x2xf32> -> vector<1x2xf32>
    %c0_14 = arith.constant 0 : index
    %c0_15 = arith.constant 0 : index
    %17 = vector.load %arg7[%c0_14, %c0_15] : memref<1x1xf32, #tpu.memory_space<vmem>>, vector<1x1xf32>
    %18 = vector.broadcast %17 : vector<1x1xf32> to vector<1x2xf32>
    %19 = arith.addf %16, %18 : vector<1x2xf32>
    %20 = arith.negf %19 : vector<1x2xf32>
    %21 = math.exp %20 : vector<1x2xf32>
    %cst_16 = arith.constant 1.000000e+00 : f32
    %22 = vector.broadcast %cst_16 : f32 to vector<1x2xf32>
    %23 = arith.addf %22, %21 : vector<1x2xf32>
    %24 = arith.divf %22, %23 : vector<1x2xf32>
    %c0_17 = arith.constant 0 : index
    %c0_18 = arith.constant 0 : index
    %25 = vector.load %arg8[%c0_17, %c0_18] : memref<1x2xf32, #tpu.memory_space<vmem>>, vector<1x2xf32>
    tpu.vector_store %arg8[%c0_17, %c0_18], %24 {strides = array<i32>} : memref<1x2xf32, #tpu.memory_space<vmem>>, vector<1x2xf32>,
    return
  }
  func.func @transform_0(%arg0: i32) -> (i32, i32) {
    %c0_i32 = arith.constant 0 : i32
    %c0_i32_0 = arith.constant 0 : i32
    return %arg0, %c0_i32 : i32, i32
  }
  func.func @transform_1(%arg0: i32) -> (i32, i32) {
    %c0_i32 = arith.constant 0 : i32
    %c0_i32_0 = arith.constant 0 : i32
    return %arg0, %c0_i32 : i32, i32
  }
  func.func @transform_2(%arg0: i32) -> (i32, i32) {
    %c0_i32 = arith.constant 0 : i32
    %c0_i32_0 = arith.constant 0 : i32
    %c0_i32_1 = arith.constant 0 : i32
    return %c0_i32, %c0_i32_0 : i32, i32
  }
  func.func @transform_3(%arg0: i32) -> (i32, i32) {
    %c0_i32 = arith.constant 0 : i32
    %c0_i32_0 = arith.constant 0 : i32
    %c0_i32_1 = arith.constant 0 : i32
    return %c0_i32, %c0_i32_0 : i32, i32
  }
  func.func @transform_4(%arg0: i32) -> (i32, i32) {
    %c0_i32 = arith.constant 0 : i32
    %c0_i32_0 = arith.constant 0 : i32
    %c0_i32_1 = arith.constant 0 : i32
    return %c0_i32, %c0_i32_0 : i32, i32
  }
  func.func @transform_5(%arg0: i32) -> (i32, i32) {
    %c0_i32 = arith.constant 0 : i32
    %c0_i32_0 = arith.constant 0 : i32
    %c0_i32_1 = arith.constant 0 : i32
    return %c0_i32, %c0_i32_0 : i32, i32
  }
  func.func @transform_6(%arg0: i32) -> (i32, i32) {
    %c0_i32 = arith.constant 0 : i32
    %c0_i32_0 = arith.constant 0 : i32
    %c0_i32_1 = arith.constant 0 : i32
    return %c0_i32, %c0_i32_0 : i32, i32
  }
  func.func @transform_7(%arg0: i32) -> (i32, i32) {
    %c0_i32 = arith.constant 0 : i32
    %c0_i32_0 = arith.constant 0 : i32
    return %arg0, %c0_i32 : i32, i32
  }
}

</mosaic_0001>

<llo_original>
// kernel: tpu_custom_call.1
$region0: #{tpu_custom_call.1}
  #allocation0 [shape = 'u32[]', space=smem, size = 0x4, offset = 0x4, fixed_abs, tag = 'smem constant byte address 0x4 - core index']
  #allocation1 [shape = 'u32[144,128]{1,0:T(1,128)}', space=vmem, size = 0x12000, scoped, tag = 'internal scratch']
  #allocation2 [shape = 'f32[1,1]{1,0:T(1,128)S(1)}', space=vmem, size = 0x200, scoped, tag = 'scoped memory for tpu_custom_call.1']
  %s0 = inlined_call_operand.vmem [shape: f32[2,32], index: 0, kind: input, shape index: {}]
  %s1 = inlined_call_operand.vmem [shape: f32[2,16], index: 1, kind: input, shape index: {}]
  %s2 = inlined_call_operand.vmem [shape: bf16[32,16], index: 2, kind: input, shape index: {}]
  %s3 = inlined_call_operand.vmem [shape: bf16[16,16], index: 3, kind: input, shape index: {}]
  %s4 = inlined_call_operand.vmem [shape: f32[1,16], index: 4, kind: input, shape index: {}]
  %s5 = inlined_call_operand.vmem [shape: f32[1,16], index: 5, kind: input, shape index: {}]
  %s6 = inlined_call_operand.<no memory space> [shape: f32[1,1], index: 6, kind: input, shape index: {}]
  %s7 = inlined_call_operand.hbm [shape: f32[1,2], index: 7, kind: output, shape index: {}]
  %s8 = sld [smem:[#allocation0]]
  $region38: #{tpu_custom_call.1} parent=0
    _
  %s10 = ssub.s32 1, %s8
  %s11 = scalar_select 0, %s10, %s8
  %v12 = vstv %s6
  %13 = vst [vmem:[#allocation2] sm:$0x1] %v12
  $region1: #{tpu_custom_call.1} parent=0
    #allocation3 [shape = 'u8[512]{0}', space=vmem, size = 0x400, scoped, tag = 'output window, operand 0, single buffered']
    #allocation4 [shape = 's32[1]{0}', space=sflag, size = 0x4, scoped, tag = 'scoped memory for tpu_custom_call.1']
    %14 = vsyncpa [#allocation4], 0
    // Predicated region
    $region2: #{tpu_custom_call.1} parent=1 // pred_check
      _
    $region3: #{tpu_custom_call.1} parent=1 // pred_check_branch
      %16 = sbr.rel (0) target = $region5
    $region4: #{tpu_custom_call.1} parent=1 // pred_region
      _
    $region5: #{tpu_custom_call.1} parent=1 // pred_fallthru
      _
    // Predicated region
    $region6: #{tpu_custom_call.1} parent=1 // pred_check
      _
    $region7: #{tpu_custom_call.1} parent=1 // pred_check_branch
      %18 = sbr.rel (0) target = $region9
    $region8: #{tpu_custom_call.1} parent=1 // pred_region
      _
    $region9: #{tpu_custom_call.1} parent=1 // pred_fallthru
      _
    // Predicated region
    $region10: #{tpu_custom_call.1} parent=1 // pred_check
      _
    $region11: #{tpu_custom_call.1} parent=1 // pred_check_branch
      %20 = sbr.rel (0) target = $region13
    $region12: #{tpu_custom_call.1} parent=1 // pred_region
      _
    $region13: #{tpu_custom_call.1} parent=1 // pred_fallthru
      _
    // Predicated region
    $region14: #{tpu_custom_call.1} parent=1 // pred_check
      _
    $region15: #{tpu_custom_call.1} parent=1 // pred_check_branch
      %22 = sbr.rel (0) target = $region17
    $region16: #{tpu_custom_call.1} parent=1 // pred_region
      _
    $region17: #{tpu_custom_call.1} parent=1 // pred_fallthru
      _
    // Predicated region
    $region18: #{tpu_custom_call.1} parent=1 // pred_check
      _
    $region19: #{tpu_custom_call.1} parent=1 // pred_check_branch
      %24 = sbr.rel (0) target = $region21
    $region20: #{tpu_custom_call.1} parent=1 // pred_region
      _
    $region21: #{tpu_custom_call.1} parent=1 // pred_fallthru
      _
    // Predicated region
    $region22: #{tpu_custom_call.1} parent=1 // pred_check
      _
    $region23: #{tpu_custom_call.1} parent=1 // pred_check_branch
      %26 = sbr.rel (0) target = $region25
    $region24: #{tpu_custom_call.1} parent=1 // pred_region
      _
    $region25: #{tpu_custom_call.1} parent=1 // pred_fallthru
      _
    // Predicated region
    $region26: #{tpu_custom_call.1} parent=1 // pred_check
      _
    $region27: #{tpu_custom_call.1} parent=1 // pred_check_branch
      %28 = sbr.rel (0) target = $region29
    $region28: #{tpu_custom_call.1} parent=1 // pred_region
      _
    $region29: #{tpu_custom_call.1} parent=1 // pred_fallthru
      _
    %v30 = vld [vmem:[%s0] sm:$0x3]
    %v31 = vpack.c.bf16 %v30, %v30
    %v32 = vld [vmem:[%s1] sm:$0x3]
    %v33 = vpack.c.bf16 %v32, %v32
    %v34 = vld [vmem:[%s2] sm:$0xf]
    %v35 = vld [vmem:[%s2 + $0x4] sm:$0xf]
    %v36 = vld [vmem:[%s2 + $0x8] sm:$0xf]
    %v37 = vld [vmem:[%s2 + $0xc] sm:$0xf]
    %v38 = vld [vmem:[%s3] sm:$0xf]
    %v39 = vld [vmem:[%s3 + $0x4] sm:$0xf]
    %v42 = vunpack.c.l.b16 %v38
    %v43 = vunpack.c.l.b16 %v39
    %v44 = vpack.c.b16 %v43, %v42
    %vm46 = vcmask 130048
    %v48 = vsel %vm46, %v33, 0
    %50 = vmatprep.subr.bf16.mxu0 0
    %51 = vmatpush1.bf16.msra.mxu0 0
    %52 = vmatprep.subr.bf16.mxu0 0
    %53 = vmatpush1.bf16.msra.mxu0 0
    %54 = vmatprep.subr.bf16.mxu0 0
    %55 = vmatpush1.bf16.msra.mxu0 0
    %56 = vmatprep.subr.bf16.mxu0 0
    %57 = vmatpush1.bf16.msra.mxu0 0
    %58 = vmatprep.subr.bf16.mxu0 0
    %59 = vmatpush1.bf16.msra.mxu0 0
    %60 = vmatprep.subr.bf16.mxu0 0
    %61 = vmatpush1.bf16.msra.mxu0 0
    %62 = vmatprep.subr.bf16.mxu0 0
    %63 = vmatpush1.bf16.msra.mxu0 0
    %64 = vmatprep.subr.bf16.mxu0 0
    %65 = vmatpush1.bf16.msra.mxu0 %v44
    %66 = vmatprep.subr.bf16.mxu0 0
    %67 = vmatpush2.bf16.msra.mxu0 0
    %68 = vmatprep.subr.bf16.mxu0 0
    %69 = vmatpush2.bf16.msra.mxu0 0
    %70 = vmatprep.subr.bf16.mxu0 0
    %71 = vmatpush2.bf16.msra.mxu0 0
    %72 = vmatprep.subr.bf16.mxu0 0
    %73 = vmatpush2.bf16.msra.mxu0 0
    %74 = vmatprep.subr.bf16.mxu0 0
    %75 = vmatpush2.bf16.msra.mxu0 0
    %76 = vmatprep.subr.bf16.mxu0 0
    %77 = vmatpush2.bf16.msra.mxu0 0
    %78 = vmatprep.subr.bf16.mxu0 0
    %79 = vmatpush2.bf16.msra.mxu0 0
    %80 = vmatprep.subr.bf16.mxu0 0
    %81 = vmatpush2.bf16.msra.mxu0 0
    %82 = vmatprep.mubr.bf16.mxu0 0
    %83 = vmatmul.mubr.bf16.gmra.mxu0 %v48
    %v84 = vpop.f32.mrf.mxu0
    %v85 = vadd.f32 0.0, %v84
    %v86 = vpop.f32.mrf.mxu0
    %v87 = vpop.f32.mrf.mxu0
    %v88 = vpop.f32.mrf.mxu0
    %89 = vdwg.mxu0
    %v94 = vunpack.c.l.b16 %v34
    %v95 = vunpack.c.l.b16 %v35
    %v96 = vunpack.c.l.b16 %v36
    %v97 = vunpack.c.l.b16 %v37
    %v98 = vpack.c.b16 %v95, %v94
    %v99 = vpack.c.b16 %v97, %v96
    %vm102 = vcmask 261120
    %v104 = vsel %vm102, %v31, 0
    %106 = vmatprep.subr.bf16.mxu0 0
    %107 = vmatpush1.bf16.msra.mxu0 0
    %108 = vmatprep.subr.bf16.mxu0 0
    %109 = vmatpush1.bf16.msra.mxu0 0
    %110 = vmatprep.subr.bf16.mxu0 0
    %111 = vmatpush1.bf16.msra.mxu0 0
    %112 = vmatprep.subr.bf16.mxu0 0
    %113 = vmatpush1.bf16.msra.mxu0 0
    %114 = vmatprep.subr.bf16.mxu0 0
    %115 = vmatpush1.bf16.msra.mxu0 0
    %116 = vmatprep.subr.bf16.mxu0 0
    %117 = vmatpush1.bf16.msra.mxu0 0
    %118 = vmatprep.subr.bf16.mxu0 0
    %119 = vmatpush1.bf16.msra.mxu0 %v99
    %120 = vmatprep.subr.bf16.mxu0 0
    %121 = vmatpush1.bf16.msra.mxu0 %v98
    %122 = vmatprep.subr.bf16.mxu0 0
    %123 = vmatpush2.bf16.msra.mxu0 0
    %124 = vmatprep.subr.bf16.mxu0 0
    %125 = vmatpush2.bf16.msra.mxu0 0
    %126 = vmatprep.subr.bf16.mxu0 0
    %127 = vmatpush2.bf16.msra.mxu0 0
    %128 = vmatprep.subr.bf16.mxu0 0
    %129 = vmatpush2.bf16.msra.mxu0 0
    %130 = vmatprep.subr.bf16.mxu0 0
    %131 = vmatpush2.bf16.msra.mxu0 0
    %132 = vmatprep.subr.bf16.mxu0 0
    %133 = vmatpush2.bf16.msra.mxu0 0
    %134 = vmatprep.subr.bf16.mxu0 0
    %135 = vmatpush2.bf16.msra.mxu0 0
    %136 = vmatprep.subr.bf16.mxu0 0
    %137 = vmatpush2.bf16.msra.mxu0 0
    %138 = vmatprep.mubr.bf16.mxu0 0
    %139 = vmatmul.mubr.bf16.gmra.mxu0 %v104
    %v140 = vpop.f32.mrf.mxu0
    %v141 = vadd.f32 %v85, %v140
    %v142 = vpop.f32.mrf.mxu0
    %v143 = vpop.f32.mrf.mxu0
    %v144 = vpop.f32.mrf.mxu0
    %145 = vdwg.mxu0
    %v146 = vld [vmem:[%s4] sm:$0x1]
    %v148 = vlaneseq
    %v149 = vshrl.u32 %v148, 7
    %v150 = vsub.s32 0, %v149
    %v151 = vrot.slane %v146, %v150
    %v153 = vadd.f32 %v141, %v151
    %v154 = vmax.f32 %v153, 0.0
    %v155 = vld [vmem:[%s5] sm:$0x1]
    %v156 = vld [vmem:[#allocation2] sm:$0x1]
    %158 = vset.pattern.permute.xlu0 0
    %159 = vperm.xlu0 %158, %v156
    %v160 = vpop.permute.xlu0 %159
    %v162 = vlaneseq
    %v163 = vshrl.u32 %v162, 7
    %v164 = vsub.s32 0, %v163
    %v165 = vrot.slane %v160, %v164
    %v167 = vsel %vm46, %v155, 0
    %v170 = vsel %vm46, %v154, 0
    %172 = vmatprep.subr.mxu0 0.0
    %173 = vmatpush1.xpose.msra.mxu0 0.0
    %174 = vmatprep.subr.mxu0 0.0
    %175 = vmatpush1.xpose.msra.mxu0 0.0
    %176 = vmatprep.subr.mxu0 0.0
    %177 = vmatpush1.xpose.msra.mxu0 0.0
    %178 = vmatprep.subr.mxu0 0.0
    %179 = vmatpush1.xpose.msra.mxu0 0.0
    %180 = vmatprep.subr.mxu0 0.0
    %181 = vmatpush1.xpose.msra.mxu0 0.0
    %182 = vmatprep.subr.mxu0 0.0
    %183 = vmatpush1.xpose.msra.mxu0 0.0
    %184 = vmatprep.subr.mxu0 0.0
    %185 = vmatpush1.xpose.msra.mxu0 0.0
    %186 = vmatprep.subr.mxu0 0.0
    %187 = vmatpush1.xpose.msra.mxu0 0.0
    %188 = vmatprep.subr.mxu0 0.0
    %189 = vmatpush1.xpose.msra.mxu0 0.0
    %190 = vmatprep.subr.mxu0 0.0
    %191 = vmatpush1.xpose.msra.mxu0 0.0
    %192 = vmatprep.subr.mxu0 0.0
    %193 = vmatpush1.xpose.msra.mxu0 0.0
    %194 = vmatprep.subr.mxu0 0.0
    %195 = vmatpush1.xpose.msra.mxu0 0.0
    %196 = vmatprep.subr.mxu0 0.0
    %197 = vmatpush1.xpose.msra.mxu0 0.0
    %198 = vmatprep.subr.mxu0 0.0
    %199 = vmatpush1.xpose.msra.mxu0 0.0
    %200 = vmatprep.subr.mxu0 0.0
    %201 = vmatpush1.xpose.msra.mxu0 0.0
    %202 = vmatprep.subr.mxu0 0.0
    %203 = vmatpush1.xpose.msra.mxu0 %v170
    %204 = vmatprep.subr.mxu0 0.0
    %205 = vmatpush2.xpose.msra.mxu0 0.0
    %206 = vmatprep.subr.mxu0 0.0
    %207 = vmatpush2.xpose.msra.mxu0 0.0
    %208 = vmatprep.subr.mxu0 0.0
    %209 = vmatpush2.xpose.msra.mxu0 0.0
    %210 = vmatprep.subr.mxu0 0.0
    %211 = vmatpush2.xpose.msra.mxu0 0.0
    %212 = vmatprep.subr.mxu0 0.0
    %213 = vmatpush2.xpose.msra.mxu0 0.0
    %214 = vmatprep.subr.mxu0 0.0
    %215 = vmatpush2.xpose.msra.mxu0 0.0
    %216 = vmatprep.subr.mxu0 0.0
    %217 = vmatpush2.xpose.msra.mxu0 0.0
    %218 = vmatprep.subr.mxu0 0.0
    %219 = vmatpush2.xpose.msra.mxu0 0.0
    %220 = vmatprep.subr.mxu0 0.0
    %221 = vmatpush2.xpose.msra.mxu0 0.0
    %222 = vmatprep.subr.mxu0 0.0
    %223 = vmatpush2.xpose.msra.mxu0 0.0
    %224 = vmatprep.subr.mxu0 0.0
    %225 = vmatpush2.xpose.msra.mxu0 0.0
    %226 = vmatprep.subr.mxu0 0.0
    %227 = vmatpush2.xpose.msra.mxu0 0.0
    %228 = vmatprep.subr.mxu0 0.0
    %229 = vmatpush2.xpose.msra.mxu0 0.0
    %230 = vmatprep.subr.mxu0 0.0
    %231 = vmatpush2.xpose.msra.mxu0 0.0
    %232 = vmatprep.subr.mxu0 0.0
    %233 = vmatpush2.xpose.msra.mxu0 0.0
    %234 = vmatprep.subr.mxu0 0.0
    %235 = vmatpush2.xpose.msra.mxu0 0.0
    %236 = vmatprep.mubr.f32.mxu0 0.0
    %237 = vmatmul.mubr.f32.gmra.mxu0 %v167
    %v238 = vpop.f32.mrf.mxu0
    %v239 = vadd.f32 %v165, %v238
    %v240 = vpop.f32.mrf.mxu0
    %241 = vdwg.mxu0
    %v242 = vxor.u32 %v239, 2147483648
    %v243 = vmul.f32 %v242, 1.442695
    %v244 = vpow.pop %v243
    %v245 = vadd.f32 %v244, 1.0
    %v246 = vrcp.pop %v245
    %v247 = vmul.f32 1.0, %v246
    %vm248 = vcmask 8192
    %249 = vst.msk [vmem:[#allocation3] sm:$0x1] %vm248, %v247
    // Predicated region
    $region30: #{tpu_custom_call.1} parent=1 // pred_check
      _
    $region31: #{tpu_custom_call.1} parent=1 // pred_check_branch
      %251 = sbr.rel (0) target = $region33
    $region32: #{tpu_custom_call.1} parent=1 // pred_region
      %s253 = ssub.s32 16, 16
      %254 = vsyncadd [#allocation4], %s253
      %s256 = sshll.u32 [#allocation3], 4
      %s257 = int_to_ptr.vmem [resolvable:$true] %s256
      %259 = dma.vmem_to_hbm [thread:$0]  %s257, 16, %s7, [#allocation4]
    $region33: #{tpu_custom_call.1} parent=1 // pred_fallthru
      _
    // Predicated region
    $region34: #{tpu_custom_call.1} parent=1 // pred_check
      _
    $region35: #{tpu_custom_call.1} parent=1 // pred_check_branch
      %261 = sbr.rel (0) target = $region37
    $region36: #{tpu_custom_call.1} parent=1 // pred_region
      %262 = dma.done [#allocation4], 16
    $region37: #{tpu_custom_call.1} parent=1 // pred_fallthru
      _
    %263 = vsyncpa [#allocation4], 1

</llo_original>
